<compile_context>
chip_gen: v7x
topology: tpu7x:2x2x1
jax: 0.10.0
libtpu: 0.0.40
codegen_flags: <defaults>
</compile_context>

<pallas_src>
import math

import jax
import jax.numpy as jnp
from jax import lax
from jax.experimental import pallas as pl
from jax.experimental.pallas import tpu as pltpu


# ---------------------------------------------------------------------------
# Hardware-aware helpers
# ---------------------------------------------------------------------------
def _vmem_capacity_bytes():
    try:
        info = pltpu.get_tpu_info()
        for attr in ("vmem_capacity_bytes", "vmem_size_bytes", "vmem_bytes"):
            v = getattr(info, attr, None)
            if v:
                return int(v)
    except Exception:
        pass
    return 64 * 1024 * 1024  # conservative: v7x per-TensorCore VMEM


def _sublane_align(dtype):
    # minimum second-minor tile: 8 for 4-byte, 16 for 2-byte, 32 for 1-byte
    return max(8, 32 // jnp.dtype(dtype).itemsize)


def _tile_and_pad(dim, pref, align):
    """Full-extent block if dim <= pref (always legal), else the largest
    aligned divisor <= pref; pad the dim minimally only if no divisor exists."""
    if dim <= pref:
        return dim, dim
    base = max((pref // align) * align, align)
    cand = base
    while cand >= align:
        if dim % cand == 0:
            return cand, dim
        cand -= align
    padded = ((dim + base - 1) // base) * base
    return base, padded


# ---------------------------------------------------------------------------
# Kernel factory: out = x @ W^T (+ bias), with/without K-axis accumulation
# ---------------------------------------------------------------------------
def _make_matmul_kernel(has_bias, w_is_kn, multi_k):
    def contract(x, w):
        if w_is_kn:           # W stored as (K, N): plain MXU matmul
            return jnp.dot(x, w, preferred_element_type=jnp.float32)
        # W stored as (N, K): contract both operands on their last dim
        return lax.dot_general(
            x, w,
            dimension_numbers=(((1,), (1,)), ((), ())),
            preferred_element_type=jnp.float32,
        )

    if multi_k:
        def kernel(x_ref, w_ref, *rest):
            if has_bias:
                b_ref, o_ref, acc_ref = rest
            else:
                o_ref, acc_ref = rest
            k = pl.program_id(2)

            @pl.when(k == 0)
            def _():
                acc_ref[...] = jnp.zeros_like(acc_ref)

            acc_ref[...] += contract(x_ref[...], w_ref[...])

            @pl.when(k == pl.num_programs(2) - 1)
            def _():
                out = acc_ref[...]
                if has_bias:
                    out = out + b_ref[...].astype(jnp.float32)
                o_ref[...] = out.astype(o_ref.dtype)
    else:
        def kernel(x_ref, w_ref, *rest):
            if has_bias:
                b_ref, o_ref = rest
            else:
                (o_ref,) = rest
            out = contract(x_ref[...], w_ref[...])
            if has_bias:
                out = out + b_ref[...].astype(jnp.float32)
            o_ref[...] = out.astype(o_ref.dtype)

    return kernel


# ---------------------------------------------------------------------------
# One-time weight packing (do at init; weights are static across calls)
# ---------------------------------------------------------------------------
def pack_weight_io(weight):
    """(out_features_ext, in_features_ext) -> (in_features_ext, out_features_ext).
    Done once at parameter-setup time so the kernel RHS is MXU-friendly and no
    per-call transpose / HBM round-trip of the weight is needed."""
    return jnp.asarray(weight).T


# ---------------------------------------------------------------------------
# Forward pass wrapper
# ---------------------------------------------------------------------------
def structured_linear_forward(x, weight, bias=None, *, out_features=None,
                              weight_layout="oi", tm=None, tn=None, tk=None):
    """StructuredLinear forward (dense realization).

    x             : (..., in_features)
    weight        : "oi": (out_features_extended, in_features_extended)
                    "io": (in_features_extended, out_features_extended) (pre-packed)
    bias          : (out_features,) or None
    out_features  : final feature count (defaults to bias size / extended size)
    returns       : (..., out_features)
    """
    if weight_layout not in ("oi", "io"):
        raise ValueError("weight_layout must be 'oi' or 'io'")
    if weight_layout == "oi":
        out_f_ext, in_f_ext = weight.shape
    else:
        in_f_ext, out_f_ext = weight.shape

    if out_features is not None:
        out_f = out_features
    elif bias is not None:
        out_f = bias.shape[0]
    else:
        out_f = out_f_ext

    lead_shape = x.shape[:-1]
    in_features = x.shape[-1]
    if in_features > in_f_ext:
        raise ValueError("in_features of x exceeds in_features_extended")

    # ---- glue: flatten leading dims --------------------------------------
    x2 = x.reshape((-1, in_features))

    # ---- preprocess(): pad last dim to in_features_extended (base: no-op) -
    if in_features < in_f_ext:
        x2 = jnp.pad(x2, ((0, 0), (0, in_f_ext - in_features)))

    M, K = x2.shape
    N = out_f_ext

    isx = jnp.dtype(x.dtype).itemsize
    isw = jnp.dtype(weight.dtype).itemsize
    iso = isx                                   # output keeps x dtype
    isb = jnp.dtype(bias.dtype).itemsize if bias is not None else 0
    align_m = _sublane_align(x.dtype)

    # ---- generation-aware VMEM budget & tile preferences ------------------
    cap = _vmem_capacity_bytes()
    if cap >= 96 * 1024 * 1024:                 # v5e / v6e (128 MiB VMEM)
        vmem_limit = 100 * 1024 * 1024
        tm_pref, tn_pref, tk_pref = 1024, 1024, 2048
    else:                                       # v7x (64 MiB / TC) or unknown
        vmem_limit = 52 * 1024 * 1024
        tm_pref, tn_pref, tk_pref = 512, 1024, 2048
    budget = int(vmem_limit * 0.85)             # headroom for compiler scratch

    explicit = (tm is not None) or (tn is not None) or (tk is not None)
    tm_pref = tm if tm is not None else tm_pref
    tn_pref = tn if tn is not None else tn_pref
    tk_pref = tk if tk is not None else tk_pref

    tm_, Mp = _tile_and_pad(M, tm_pref, align_m)
    tn_, Np = _tile_and_pad(N, tn_pref, 128)

    def fits_single_k(tm_c, tn_c, k_c):
        return (2 * (tm_c * k_c * isx + tn_c * k_c * isw + tm_c * tn_c * iso)
                + 2 * tn_c * isb) <= budget

    # ---- K tiling: prefer a single K block (no accumulator / no k axis) ---
    if explicit:
        tk_, Kp = _tile_and_pad(K, tk_pref, 128)
        multi_k = (Kp // tk_) > 1
    else:
        if fits_single_k(tm_, tn_, K):
            tk_, Kp, multi_k = K, K, False
        else:
            tk_eff = tk_pref
            while tk_eff > 256:
                need = (2 * (tm_ * tk_eff * isx + tn_ * tk_eff * isw)
                        + 2 * tm_ * tn_ * iso + tm_ * tn_ * 4 + 2 * tn_ * isb)
                if need <= budget:
                    break
                tk_eff //= 2
            tk_, Kp = _tile_and_pad(K, tk_eff, 128)
            multi_k = (Kp // tk_) > 1
            if not multi_k:
                tk_ = Kp

    # ---- v7x: make sure both TensorCores get work on the parallel axes ----
    if (not explicit) and cap < 96 * 1024 * 1024:
        if (Mp // tm_) * (Np // tn_) == 1 and Np >= 256 and Np % 256 == 0:
            tn_ = Np // 2

    # ---- fallback padding (tiles are exact divisors in the common case;
    #      for static weights with awkward shapes, pre-pad once at init) -----
    if (Mp != M) or (Kp != K):
        x2 = jnp.pad(x2, ((0, Mp - M), (0, Kp - K)))
    w2 = weight
    if weight_layout == "oi":
        if (Np != N) or (Kp != K):
            w2 = jnp.pad(weight, ((0, Np - N), (0, Kp - K)))
    else:
        if (Np != N) or (Kp != K):
            w2 = jnp.pad(weight, ((0, Kp - K), (0, Np - N)))

    has_bias = bias is not None
    w_is_kn = weight_layout == "io"

    # ---- grid / specs ------------------------------------------------------
    if multi_k:
        grid = (Mp // tm_, Np // tn_, Kp // tk_)
        dims = ("parallel", "parallel", "arbitrary")
        x_spec = pl.BlockSpec((tm_, tk_), lambda i, j, k: (i, k))
        if w_is_kn:
            w_spec = pl.BlockSpec((tk_, tn_), lambda i, j, k: (k, j))
        else:
            w_spec = pl.BlockSpec((tn_, tk_), lambda i, j, k: (j, k))
        b_spec = pl.BlockSpec((1, tn_), lambda i, j, k: (0, j))
        o_spec = pl.BlockSpec((tm_, tn_), lambda i, j, k: (i, j))
        scratch = [pltpu.VMEM((tm_, tn_), jnp.float32)]
    else:
        grid = (Mp // tm_, Np // tn_)
        dims = ("parallel", "parallel")
        x_spec = pl.BlockSpec((tm_, Kp), lambda i, j: (i, 0))
        if w_is_kn:
            w_spec = pl.BlockSpec((Kp, tn_), lambda i, j: (0, j))
        else:
            w_spec = pl.BlockSpec((tn_, Kp), lambda i, j: (j, 0))
        b_spec = pl.BlockSpec((1, tn_), lambda i, j: (0, j))
        o_spec = pl.BlockSpec((tm_, tn_), lambda i, j: (i, j))
        scratch = []

    gi, gj = Mp // tm_, Np // tn_
    cost = pl.CostEstimate(
        flops=2 * M * N * K,
        transcendentals=0,
        bytes_accessed=(M * K * isx * gj + N * K * isw * gi + M * N * iso
                        + (N * isb if has_bias else 0)),
    )
    cparams = pltpu.CompilerParams(
        dimension_semantics=dims,
        vmem_limit_bytes=vmem_limit,
    )

    in_specs = [x_spec, w_spec]
    operands = [x2, w2]
    if has_bias:
        b_row = bias.reshape(1, N)
        if Np != N:
            b_row = jnp.pad(b_row, ((0, 0), (0, Np - N)))
        in_specs.append(b_spec)
        operands.append(b_row)

    kernel = _make_matmul_kernel(has_bias=has_bias, w_is_kn=w_is_kn, multi_k=multi_k)

    out = pl.pallas_call(
        kernel,
        out_shape=jax.ShapeDtypeStruct((Mp, Np), x.dtype),
        grid_spec=pltpu.PrefetchScalarGridSpec(
            num_scalar_prefetch=0,
            grid=grid,
            in_specs=in_specs,
            out_specs=o_spec,
            scratch_shapes=scratch,
        ),
        compiler_params=cparams,
        cost_estimate=cost,
    )(*operands)

    # ---- strip tiling pad + postprocess(): slice to out_features ----------
    if (Mp != M) or (Np != out_f):
        out = out[:M, :out_f]

    return out.reshape(lead_shape + (out_f,))


# ---------------------------------------------------------------------------
# Deterministic parameter initialization (mirrors reset_parameters()):
#   weight <- kaiming_uniform_(a=sqrt(5)) on a dense (out, in) weight
#   bias   <- uniform(-1/sqrt(fan_in), 1/sqrt(fan_in)), fan_in = bias.shape[-1]
#   (bias fan_in = out_features is intentional fidelity to the PyTorch source
#    'as written', which differs from standard nn.Linear bias init)
# ---------------------------------------------------------------------------
def init_structured_linear_params(key, in_features, out_features, dtype=jnp.float32):
    k_w, k_b = jax.random.split(key)

    a = math.sqrt(5.0)
    gain = math.sqrt(2.0 / (1.0 + a * a))
    w_bound = gain * math.sqrt(3.0 / in_features)
    weight = jax.random.uniform(
        k_w, (out_features, in_features), dtype=dtype, minval=-w_bound, maxval=w_bound
    )

    b_bound = 1.0 / math.sqrt(out_features) if out_features > 0 else 0.0
    bias = jax.random.uniform(
        k_b, (out_features,), dtype=dtype, minval=-b_bound, maxval=b_bound
    )
    return weight, bias


# TODO(synk): forward_matmul / set_weights_from_dense_init / saving are abstract
# in StructuredLinear; subclasses (e.g. Monarch block-diagonal factorizations)
# would replace the dense x @ W.T contraction inside the kernel.

if __name__ == "__main__":
    key = jax.random.PRNGKey(0)
    k_x, k_p, k_x2, k_p2 = jax.random.split(key, 4)

    # --- base case: bias, native (out,in) weight, single-K fast path --------
    batch, seq = 2, 4
    in_features, out_features = 32, 32
    x = jax.random.normal(k_x, (batch, seq, in_features), dtype=jnp.float32)
    weight, bias = init_structured_linear_params(k_p, in_features, out_features)

    out = jax.block_until_ready(structured_linear_forward(x, weight, bias))
    ref = x @ weight.T + bias
    assert out.shape == (batch, seq, out_features)
    assert jnp.allclose(out, ref, atol=1e-5, rtol=1e-5)

    # --- no-bias path (explicit out_features fixes the latent slice bug) ----
    out_nb = jax.block_until_ready(
        structured_linear_forward(x, weight, None, out_features=out_features))
    assert jnp.allclose(out_nb, x @ weight.T, atol=1e-5, rtol=1e-5)

    # --- pre-packed (in,out) weight layout (one-time transpose at init) -----
    w_io = pack_weight_io(weight)
    out_io = jax.block_until_ready(
        structured_linear_forward(x, w_io, bias, weight_layout="io"))
    assert jnp.allclose(out_io, ref, atol=1e-5, rtol=1e-5)

    # --- explicit small tiles exercising the multi-K accumulator grid -------
    in2, out2 = 256, 128
    x_b = jax.random.normal(k_x2, (batch, seq, in2), dtype=jnp.float32)
    w_b, b_b = init_structured_linear_params(k_p2, in2, out2)
    out_b = jax.block_until_ready(
        structured_linear_forward(x_b, w_b, b_b, tm=8, tn=128, tk=128))
    ref_b = x_b @ w_b.T + b_b
    assert out_b.shape == (batch, seq, out2)
    assert jnp.allclose(out_b, ref_b, atol=1e-4, rtol=1e-4)

    # --- bf16 inputs (halved HBM/VMEM traffic, f32 MXU accumulation) --------
    x_h = x.astype(jnp.bfloat16)
    w_h = weight.astype(jnp.bfloat16)
    b_h = bias.astype(jnp.bfloat16)
    out_h = jax.block_until_ready(structured_linear_forward(x_h, w_h, b_h))
    ref_h = (x_h.astype(jnp.float32) @ w_h.astype(jnp.float32).T
             + b_h.astype(jnp.float32))
    assert out_h.shape == (batch, seq, out_features)
    assert jnp.allclose(out_h.astype(jnp.float32), ref_h, atol=5e-2, rtol=5e-2)

    print("KERNEL_OK")
</pallas_src>

<mosaic_0001>
module attributes {stable_mosaic.version = 11 : i64} {
  func.func @kernel(%arg0: i32, %arg1: i32, %arg2: memref<8x32xf32, #tpu.memory_space<vmem>>, %arg3: memref<32x32xf32, #tpu.memory_space<vmem>>, %arg4: memref<1x32xf32, #tpu.memory_space<vmem>>, %arg5: memref<8x32xf32, #tpu.memory_space<vmem>>) attributes {dimension_semantics = [#tpu.dimension_semantics<parallel>, #tpu.dimension_semantics<parallel>], iteration_bounds = array<i64: 1, 1>, scalar_prefetch = 0 : i64, scratch_operands = 0 : i64, tpu.core_type = #tpu.core_type<tc>, window_params = [{transform_indices = @transform_0, window_bounds = array<i64: 8, 32>}, {transform_indices = @transform_1, window_bounds = array<i64: 32, 32>}, {transform_indices = @transform_2, window_bounds = array<i64: 1, 32>}, {transform_indices = @transform_3, window_bounds = array<i64: 8, 32>}]} {
    %c0 = arith.constant 0 : index
    %c0_0 = arith.constant 0 : index
    %0 = vector.load %arg2[%c0, %c0_0] : memref<8x32xf32, #tpu.memory_space<vmem>>, vector<8x32xf32>
    %c0_1 = arith.constant 0 : index
    %c0_2 = arith.constant 0 : index
    %1 = vector.load %arg3[%c0_1, %c0_2] : memref<32x32xf32, #tpu.memory_space<vmem>>, vector<32x32xf32>
    %cst = arith.constant dense<0.000000e+00> : vector<8x32xf32>
    %2 = tpu.matmul %0, %1, %cst {dimension_numbers = #tpu.dot_dimension_numbers<[1], [1], [0], [0], [0, 0, 1, 0], [], []>} : vector<8x32xf32>, vector<32x32xf32>, vector<8x32xf32> -> vector<8x32xf32>
    %c0_3 = arith.constant 0 : index
    %c0_4 = arith.constant 0 : index
    %3 = vector.load %arg4[%c0_3, %c0_4] : memref<1x32xf32, #tpu.memory_space<vmem>>, vector<1x32xf32>
    %4 = vector.broadcast %3 : vector<1x32xf32> to vector<8x32xf32>
    %5 = arith.addf %2, %4 : vector<8x32xf32>
    %c0_5 = arith.constant 0 : index
    %c0_6 = arith.constant 0 : index
    %6 = vector.load %arg5[%c0_5, %c0_6] : memref<8x32xf32, #tpu.memory_space<vmem>>, vector<8x32xf32>
    tpu.vector_store %arg5[%c0_5, %c0_6], %5 {strides = array<i32>} : memref<8x32xf32, #tpu.memory_space<vmem>>, vector<8x32xf32>,
    return
  }
  func.func @transform_0(%arg0: i32, %arg1: i32) -> (i32, i32) {
    %c0_i32 = arith.constant 0 : i32
    %c0_i32_0 = arith.constant 0 : i32
    return %arg0, %c0_i32 : i32, i32
  }
  func.func @transform_1(%arg0: i32, %arg1: i32) -> (i32, i32) {
    %c0_i32 = arith.constant 0 : i32
    %c0_i32_0 = arith.constant 0 : i32
    return %arg1, %c0_i32 : i32, i32
  }
  func.func @transform_2(%arg0: i32, %arg1: i32) -> (i32, i32) {
    %c0_i32 = arith.constant 0 : i32
    %c0_i32_0 = arith.constant 0 : i32
    return %c0_i32, %arg1 : i32, i32
  }
  func.func @transform_3(%arg0: i32, %arg1: i32) -> (i32, i32) {
    %c0_i32 = arith.constant 0 : i32
    return %arg0, %arg1 : i32, i32
  }
}

</mosaic_0001>

<llo_original>
// kernel: tpu_custom_call.1
$region0: #{tpu_custom_call.1}
  #allocation0 [shape = 'u32[]', space=smem, size = 0x4, offset = 0x4, fixed_abs, tag = 'smem constant byte address 0x4 - core index']
  #allocation1 [shape = 'u32[144,128]{1,0:T(1,128)}', space=vmem, size = 0x12000, scoped, tag = 'internal scratch']
  %s0 = inlined_call_operand.hbm [shape: f32[8,32], index: 0, kind: input, shape index: {}]
  %s1 = inlined_call_operand.hbm [shape: f32[32,32], index: 1, kind: input, shape index: {}]
  %s2 = inlined_call_operand.vmem [shape: f32[1,32], index: 2, kind: input, shape index: {}]
  %s3 = inlined_call_operand.hbm [shape: f32[8,32], index: 3, kind: output, shape index: {}]
  %s4 = sld [smem:[#allocation0]]
  $region30: #{tpu_custom_call.1} parent=0
    _
  %s6 = ssub.s32 1, %s4
  %s7 = scalar_select 0, %s6, %s4
  $region1: #{tpu_custom_call.1} parent=0
    #allocation2 [shape = 'u8[4096]{0}', space=vmem, size = 0x1000, scoped, tag = 'input window, operand 0, single buffered']
    #allocation3 [shape = 's32[1]{0}', space=sflag, size = 0x4, scoped, tag = 'scoped memory for tpu_custom_call.1']
    #allocation4 [shape = 's32[1]{0}', space=sflag, size = 0x4, scoped, tag = 'scoped memory for tpu_custom_call.1']
    #allocation5 [shape = 'u8[16384]{0}', space=vmem, size = 0x4000, scoped, tag = 'input window, operand 1, single buffered']
    #allocation6 [shape = 's32[1]{0}', space=sflag, size = 0x4, scoped, tag = 'scoped memory for tpu_custom_call.1']
    #allocation7 [shape = 'u8[4096]{0}', space=vmem, size = 0x1000, scoped, tag = 'output window, operand 0, single buffered']
    %8 = vsyncpa [#allocation3], 0
    %9 = vsyncpa [#allocation6], 0
    %10 = vsyncpa [#allocation4], 0
    // Predicated region
    $region2: #{tpu_custom_call.1} parent=1 // pred_check
      _
    $region3: #{tpu_custom_call.1} parent=1 // pred_check_branch
      %12 = sbr.rel (0) target = $region5
    $region4: #{tpu_custom_call.1} parent=1 // pred_region
      %s14 = ssub.s32 128, 128
      %15 = vsyncadd [#allocation3], %s14
      %s17 = sshll.u32 [#allocation2], 4
      %s18 = int_to_ptr.vmem [resolvable:$true] %s17
      %20 = dma.hbm_to_vmem [thread:$0]  %s0, 128, %s18, [#allocation3]
    $region5: #{tpu_custom_call.1} parent=1 // pred_fallthru
      _
    // Predicated region
    $region6: #{tpu_custom_call.1} parent=1 // pred_check
      _
    $region7: #{tpu_custom_call.1} parent=1 // pred_check_branch
      %22 = sbr.rel (0) target = $region9
    $region8: #{tpu_custom_call.1} parent=1 // pred_region
      %s24 = ssub.s32 512, 512
      %25 = vsyncadd [#allocation6], %s24
      %s26 = sshll.u32 [#allocation5], 4
      %s27 = int_to_ptr.vmem [resolvable:$true] %s26
      %32 = dma.hbm_to_vmem [thread:$0]  %s1, 512, %s27, [#allocation6], 128, 128, 8
    $region9: #{tpu_custom_call.1} parent=1 // pred_fallthru
      _
    // Predicated region
    $region10: #{tpu_custom_call.1} parent=1 // pred_check
      _
    $region11: #{tpu_custom_call.1} parent=1 // pred_check_branch
      %34 = sbr.rel (0) target = $region13
    $region12: #{tpu_custom_call.1} parent=1 // pred_region
      _
    $region13: #{tpu_custom_call.1} parent=1 // pred_fallthru
      _
    // Predicated region
    $region14: #{tpu_custom_call.1} parent=1 // pred_check
      _
    $region15: #{tpu_custom_call.1} parent=1 // pred_check_branch
      %36 = sbr.rel (0) target = $region17
    $region16: #{tpu_custom_call.1} parent=1 // pred_region
      %37 = dma.done [#allocation3], 128
    $region17: #{tpu_custom_call.1} parent=1 // pred_fallthru
      _
    // Predicated region
    $region18: #{tpu_custom_call.1} parent=1 // pred_check
      _
    $region19: #{tpu_custom_call.1} parent=1 // pred_check_branch
      %39 = sbr.rel (0) target = $region21
    $region20: #{tpu_custom_call.1} parent=1 // pred_region
      %40 = dma.done [#allocation6], 512
    $region21: #{tpu_custom_call.1} parent=1 // pred_fallthru
      _
    %v41 = vld [vmem:[#allocation2] sm:$0xff]
    %v42 = vld [vmem:[#allocation5] sm:$0xff]
    %v43 = vld [vmem:[#allocation5 + $0x8] sm:$0xff]
    %v44 = vld [vmem:[#allocation5 + $0x10] sm:$0xff]
    %v45 = vld [vmem:[#allocation5 + $0x18] sm:$0xff]
    %v46 = vld [vmem:[%s2] sm:$0x1]
    %v48 = vlaneseq
    %v49 = vshrl.u32 %v48, 7
    %v50 = vsub.s32 0, %v49
    %v51 = vrot.slane %v46, %v50
    %vm53 = vcmask 261120
    %v55 = vsel %vm53, %v41, 0
    %v58 = vsel %vm53, %v42, 0
    %v61 = vsel %vm53, %v43, 0
    %v64 = vsel %vm53, %v44, 0
    %v67 = vsel %vm53, %v45, 0
    %69 = vmatprep.subr.mxu0 0.0
    %70 = vmatpush1.xpose.msra.mxu0 %v58
    %71 = vmatprep.subr.mxu0 0.0
    %72 = vmatpush1.xpose.msra.mxu0 %v61
    %73 = vmatprep.subr.mxu0 0.0
    %74 = vmatpush1.xpose.msra.mxu0 %v64
    %75 = vmatprep.subr.mxu0 0.0
    %76 = vmatpush1.xpose.msra.mxu0 %v67
    %77 = vmatprep.subr.mxu0 0.0
    %78 = vmatpush1.xpose.msra.mxu0 0.0
    %79 = vmatprep.subr.mxu0 0.0
    %80 = vmatpush1.xpose.msra.mxu0 0.0
    %81 = vmatprep.subr.mxu0 0.0
    %82 = vmatpush1.xpose.msra.mxu0 0.0
    %83 = vmatprep.subr.mxu0 0.0
    %84 = vmatpush1.xpose.msra.mxu0 0.0
    %85 = vmatprep.subr.mxu0 0.0
    %86 = vmatpush1.xpose.msra.mxu0 0.0
    %87 = vmatprep.subr.mxu0 0.0
    %88 = vmatpush1.xpose.msra.mxu0 0.0
    %89 = vmatprep.subr.mxu0 0.0
    %90 = vmatpush1.xpose.msra.mxu0 0.0
    %91 = vmatprep.subr.mxu0 0.0
    %92 = vmatpush1.xpose.msra.mxu0 0.0
    %93 = vmatprep.subr.mxu0 0.0
    %94 = vmatpush1.xpose.msra.mxu0 0.0
    %95 = vmatprep.subr.mxu0 0.0
    %96 = vmatpush1.xpose.msra.mxu0 0.0
    %97 = vmatprep.subr.mxu0 0.0
    %98 = vmatpush1.xpose.msra.mxu0 0.0
    %99 = vmatprep.subr.mxu0 0.0
    %100 = vmatpush1.xpose.msra.mxu0 0.0
    %101 = vmatprep.subr.mxu0 0.0
    %102 = vmatpush1.xpose.msra.mxu0 0.0
    %103 = vmatprep.subr.mxu0 0.0
    %104 = vmatpush1.xpose.msra.mxu0 0.0
    %105 = vmatprep.subr.mxu0 0.0
    %106 = vmatpush1.xpose.msra.mxu0 0.0
    %107 = vmatprep.subr.mxu0 0.0
    %108 = vmatpush1.xpose.msra.mxu0 0.0
    %109 = vmatprep.subr.mxu0 0.0
    %110 = vmatpush1.xpose.msra.mxu0 0.0
    %111 = vmatprep.subr.mxu0 0.0
    %112 = vmatpush1.xpose.msra.mxu0 0.0
    %113 = vmatprep.subr.mxu0 0.0
    %114 = vmatpush1.xpose.msra.mxu0 0.0
    %115 = vmatprep.subr.mxu0 0.0
    %116 = vmatpush1.xpose.msra.mxu0 0.0
    %117 = vmatprep.subr.mxu0 0.0
    %118 = vmatpush1.xpose.msra.mxu0 0.0
    %119 = vmatprep.subr.mxu0 0.0
    %120 = vmatpush1.xpose.msra.mxu0 0.0
    %121 = vmatprep.subr.mxu0 0.0
    %122 = vmatpush1.xpose.msra.mxu0 0.0
    %123 = vmatprep.subr.mxu0 0.0
    %124 = vmatpush1.xpose.msra.mxu0 0.0
    %125 = vmatprep.subr.mxu0 0.0
    %126 = vmatpush1.xpose.msra.mxu0 0.0
    %127 = vmatprep.subr.mxu0 0.0
    %128 = vmatpush1.xpose.msra.mxu0 0.0
    %129 = vmatprep.subr.mxu0 0.0
    %130 = vmatpush1.xpose.msra.mxu0 0.0
    %131 = vmatprep.subr.mxu0 0.0
    %132 = vmatpush1.xpose.msra.mxu0 0.0
    %133 = vmatprep.mubr.f32.mxu0 0.0
    %134 = vmatmul.mubr.f32.gmra.mrb[0].mxu0 %v55
    %v135 = vpop.f32.mrb[0].mxu0
    %v136 = vadd.f32 %v51, %v135
    %v137 = vpop.f32.mrb[0].mxu0
    %138 = vdwg.mxu0
    %139 = vst.msk [vmem:[#allocation7] sm:$0xff] %vm53, %v136
    // Predicated region
    $region22: #{tpu_custom_call.1} parent=1 // pred_check
      _
    $region23: #{tpu_custom_call.1} parent=1 // pred_check_branch
      %141 = sbr.rel (0) target = $region25
    $region24: #{tpu_custom_call.1} parent=1 // pred_region
      %s143 = ssub.s32 128, 128
      %144 = vsyncadd [#allocation4], %s143
      %s146 = sshll.u32 [#allocation7], 4
      %s147 = int_to_ptr.vmem [resolvable:$true] %s146
      %149 = dma.vmem_to_hbm [thread:$0]  %s147, 128, %s3, [#allocation4]
    $region25: #{tpu_custom_call.1} parent=1 // pred_fallthru
      _
    // Predicated region
    $region26: #{tpu_custom_call.1} parent=1 // pred_check
      _
    $region27: #{tpu_custom_call.1} parent=1 // pred_check_branch
      %151 = sbr.rel (0) target = $region29
    $region28: #{tpu_custom_call.1} parent=1 // pred_region
      %152 = dma.done [#allocation4], 128
    $region29: #{tpu_custom_call.1} parent=1 // pred_fallthru
      _
    %153 = vsyncpa [#allocation3], 1
    %154 = vsyncpa [#allocation6], 1
    %155 = vsyncpa [#allocation4], 1

</llo_original>
